<compile_context>
chip_gen: v5e
topology: v5e:2x2
jax: 0.10.0
libtpu: 0.0.40
codegen_flags: <defaults>
</compile_context>

<pallas_src>
import math

import jax
import jax.numpy as jnp
from jax.experimental import pallas as pl
from jax.experimental.pallas import tpu as pltpu


def layerscale_kernel(x_ref, gamma_ref, o_ref):
    # x_ref: (TM, W) tile; gamma_ref: (1, W) resident f32 row; compute in f32.
    o_ref[...] = (x_ref[...].astype(jnp.float32) * gamma_ref[...]).astype(o_ref.dtype)


def _sublane_multiple(dtype) -> int:
    itemsize = jnp.dtype(dtype).itemsize
    if itemsize >= 4:
        return 8
    if itemsize == 2:
        return 16
    return 32


def _choose_width(num_rows: int, dim: int, itemsize: int,
                  max_width_bytes: int = 256 << 10):
    """Pick a lane-dense row width W (multiple of 128 when possible).

    Returns (W, repeat) where repeat = W // dim is how many times gamma is tiled
    along a row. Falls back to (dim, 1) when repacking is not possible.
    """
    if dim % 128 == 0:
        return dim, 1
    lcm = dim * 128 // math.gcd(dim, 128)  # smallest multiple of both dim and 128
    repeat = lcm // dim
    if num_rows % repeat == 0 and lcm * itemsize <= max_width_bytes:
        return lcm, repeat
    # TODO(synk): pad num_rows up to a multiple of `repeat` (one extra HBM copy)
    # instead of this masked-store fallback, if profiles show vst.msk dominating.
    return dim, 1


def _pick_tile_rows(n_rows: int, width: int, dtype, target_bytes: int = 2 << 20) -> int:
    """Row-tile size: ~2 MiB blocks, sublane-aligned, and a >=2-step grid if possible."""
    itemsize = jnp.dtype(dtype).itemsize
    sub = _sublane_multiple(dtype)
    rows = max(1, target_bytes // (width * itemsize))
    rows = max(sub, (rows // sub) * sub)           # dtype-aligned sublane count
    cap = ((n_rows + sub - 1) // sub) * sub        # never bigger than the array
    rows = min(rows, cap)
    # v7x megacore: if the whole array fits one block but there are enough rows,
    # split it so the "parallel" grid axis can run on both TensorCores.
    if n_rows > sub and rows >= n_rows:
        half = ((pl.cdiv(n_rows, 2) + sub - 1) // sub) * sub
        rows = max(sub, min(rows, half))
    return rows


def layer_scale(x, gamma, *, donate_x: bool = False):
    """x: (..., D); gamma: (D,). Returns x * gamma with x's dtype/shape."""
    orig_shape = x.shape
    D = orig_shape[-1]
    dtype = x.dtype
    itemsize = jnp.dtype(dtype).itemsize
    num_rows = x.size // D
    gamma_f32 = gamma.astype(jnp.float32)

    W, repeat = _choose_width(num_rows, D, itemsize)
    if repeat == 1 and W == D:
        x2 = x.reshape(-1, D)
        gamma2 = gamma_f32.reshape(1, D)
    else:
        # Lane-dense repack: rows of width W (multiple of 128); gamma tiled to match.
        x2 = x.reshape(-1, W)
        gamma2 = jnp.tile(gamma_f32, repeat).reshape(1, W)

    M = x2.shape[0]
    tile_rows = _pick_tile_rows(M, W, dtype)
    grid = (pl.cdiv(M, tile_rows),)  # ragged last block: reads padded, writes masked

    # VMEM budget: double-buffered in + out blocks + resident gamma + headroom.
    block_bytes = tile_rows * W * itemsize
    gamma_bytes = W * 4
    vmem_limit = 4 * block_bytes + 2 * gamma_bytes + (2 << 20)
    vmem_limit = int(min(max(vmem_limit, 4 << 20), 48 << 20))  # headroom under v7x 64 MiB

    cost = pl.CostEstimate(
        flops=M * W,
        transcendentals=0,
        bytes_accessed=2 * M * W * itemsize + gamma_bytes,
    )

    call_kwargs = {}
    if donate_x:
        # Caller must donate x (e.g. via jax.jit donate_argnums) for this to avoid
        # a defensive copy; mirrors timm's inplace x.mul_ semantics.
        call_kwargs["input_output_aliases"] = {0: 0}

    out = pl.pallas_call(
        layerscale_kernel,
        out_shape=jax.ShapeDtypeStruct((M, W), dtype),
        grid_spec=pltpu.PrefetchScalarGridSpec(
            num_scalar_prefetch=0,
            grid=grid,
            in_specs=[
                pl.BlockSpec((tile_rows, W), lambda i: (i, 0)),
                pl.BlockSpec((1, W), lambda i: (0, 0)),  # gamma stays resident
            ],
            out_specs=pl.BlockSpec((tile_rows, W), lambda i: (i, 0)),
        ),
        compiler_params=pltpu.CompilerParams(
            dimension_semantics=("parallel",),
            vmem_limit_bytes=vmem_limit,
        ),
        cost_estimate=cost,
        **call_kwargs,
    )(x2, gamma2)

    return out.reshape(orig_shape)


if __name__ == "__main__":
    key = jax.random.PRNGKey(0)
    init_values = 1e-5

    # Primary check: small ViT-like (B, N, D) with D < 128 -> lane-dense repack path.
    B, N, D = 2, 8, 32
    x = jax.random.normal(key, (B, N, D), dtype=jnp.float32)
    gamma = init_values * jnp.ones((D,), dtype=jnp.float32)  # nn.Parameter(init * ones(dim))
    y = jax.block_until_ready(layer_scale(x, gamma))
    ref = x * gamma
    assert y.shape == x.shape and y.dtype == x.dtype
    assert jnp.allclose(y, ref, atol=1e-7, rtol=1e-6), "f32 mismatch vs reference"

    # Secondary check: bf16 activations, f32 gamma param (f32 compute inside the
    # kernel), D % 128 == 0, ragged >=2-step row grid (v7x megacore path).
    B2, N2, D2 = 2, 197, 384
    x_b = jax.random.normal(jax.random.PRNGKey(1), (B2, N2, D2), dtype=jnp.bfloat16)
    gamma_b = init_values * jnp.ones((D2,), dtype=jnp.float32)
    y_b = jax.block_until_ready(layer_scale(x_b, gamma_b))
    ref_b = (x_b.astype(jnp.float32) * gamma_b).astype(jnp.bfloat16)
    assert y_b.shape == x_b.shape and y_b.dtype == x_b.dtype
    assert jnp.allclose(y_b.astype(jnp.float32), ref_b.astype(jnp.float32),
                        atol=1e-6, rtol=1e-2), "bf16 mismatch vs reference"

    print("KERNEL_OK")
</pallas_src>

<mosaic_0001>
module attributes {stable_mosaic.version = 11 : i64} {
  func.func @layerscale_kernel(%arg0: i32, %arg1: memref<8x128xf32, #tpu.memory_space<vmem>>, %arg2: memref<1x128xf32, #tpu.memory_space<vmem>>, %arg3: memref<8x128xf32, #tpu.memory_space<vmem>>) attributes {dimension_semantics = [#tpu.dimension_semantics<parallel>], iteration_bounds = array<i64: 1>, scalar_prefetch = 0 : i64, scratch_operands = 0 : i64, tpu.core_type = #tpu.core_type<tc>, window_params = [{transform_indices = @transform_0, window_bounds = array<i64: 8, 128>}, {pipeline_mode = #tpu.pipeline_mode<synchronous>, transform_indices = @transform_1, window_bounds = array<i64: 1, 128>}, {transform_indices = @transform_2, window_bounds = array<i64: 8, 128>}]} {
    %c0 = arith.constant 0 : index
    %c0_0 = arith.constant 0 : index
    %0 = vector.load %arg1[%c0, %c0_0] : memref<8x128xf32, #tpu.memory_space<vmem>>, vector<8x128xf32>
    %c0_1 = arith.constant 0 : index
    %c0_2 = arith.constant 0 : index
    %1 = vector.load %arg2[%c0_1, %c0_2] : memref<1x128xf32, #tpu.memory_space<vmem>>, vector<1x128xf32>
    %2 = vector.broadcast %1 : vector<1x128xf32> to vector<8x128xf32>
    %3 = arith.mulf %0, %2 : vector<8x128xf32>
    %c0_3 = arith.constant 0 : index
    %c0_4 = arith.constant 0 : index
    %4 = vector.load %arg3[%c0_3, %c0_4] : memref<8x128xf32, #tpu.memory_space<vmem>>, vector<8x128xf32>
    tpu.vector_store %arg3[%c0_3, %c0_4], %3 {strides = array<i32>} : memref<8x128xf32, #tpu.memory_space<vmem>>, vector<8x128xf32>,
    return
  }
  func.func @transform_0(%arg0: i32) -> (i32, i32) {
    %c0_i32 = arith.constant 0 : i32
    %c0_i32_0 = arith.constant 0 : i32
    return %arg0, %c0_i32 : i32, i32
  }
  func.func @transform_1(%arg0: i32) -> (i32, i32) {
    %c0_i32 = arith.constant 0 : i32
    %c0_i32_0 = arith.constant 0 : i32
    %c0_i32_1 = arith.constant 0 : i32
    return %c0_i32, %c0_i32_0 : i32, i32
  }
  func.func @transform_2(%arg0: i32) -> (i32, i32) {
    %c0_i32 = arith.constant 0 : i32
    %c0_i32_0 = arith.constant 0 : i32
    return %arg0, %c0_i32 : i32, i32
  }
}

</mosaic_0001>

<llo_original>
// kernel: tpu_custom_call.1
$region0: #{tpu_custom_call.1}
  #allocation0 [shape = 'u32[]', space=smem, size = 0x4, offset = 0x4, fixed_abs, tag = 'smem constant byte address 0x4 - core index']
  #allocation1 [shape = 'u32[72,128]{1,0:T(1,128)}', space=vmem, size = 0x9000, scoped, tag = 'internal scratch']
  %s0 = inlined_call_operand.hbm [shape: f32[4,128], index: 0, kind: input, shape index: {}]
  %s1 = inlined_call_operand.hbm [shape: f32[1,128], index: 1, kind: input, shape index: {}]
  %s2 = inlined_call_operand.hbm [shape: f32[4,128], index: 2, kind: output, shape index: {}]
  %s3 = sld [smem:[#allocation0]]
  $region26: #{tpu_custom_call.1} parent=0
    _
  %s5 = ssub.s32 1, %s3
  %s6 = scalar_select 0, %s5, %s3
  $region1: #{tpu_custom_call.1} parent=0
    #allocation2 [shape = 'u8[4096]{0}', space=vmem, size = 0x1000, scoped, tag = 'input window, operand 0, single buffered']
    #allocation3 [shape = 's32[1]{0}', space=sflag, size = 0x4, scoped, tag = 'scoped memory for tpu_custom_call.1']
    #allocation4 [shape = 's32[1]{0}', space=sflag, size = 0x4, scoped, tag = 'scoped memory for tpu_custom_call.1']
    #allocation5 [shape = 'u8[512]{0}', space=vmem, size = 0x400, scoped, tag = 'input window, operand 1, single buffered']
    #allocation6 [shape = 's32[1]{0}', space=sflag, size = 0x4, scoped, tag = 'scoped memory for tpu_custom_call.1']
    #allocation7 [shape = 'u8[4096]{0}', space=vmem, size = 0x1000, scoped, tag = 'output window, operand 0, single buffered']
    %7 = vsyncpa [#allocation3], 0
    %8 = vsyncpa [#allocation6], 0
    %9 = vsyncpa [#allocation4], 0
    // Predicated region
    $region2: #{tpu_custom_call.1} parent=1 // pred_check
      _
    $region3: #{tpu_custom_call.1} parent=1 // pred_check_branch
      %11 = sbr.rel (0) target = $region5
    $region4: #{tpu_custom_call.1} parent=1 // pred_region
      %13 = vsyncadd [#allocation3], 64
      %s14 = sshll.u32 %s0, 4
      %s15 = int_to_ptr.hbm [resolvable:$true] %s14
      %s16 = sshll.u32 [#allocation2], 4
      %s17 = int_to_ptr.vmem [resolvable:$true] %s16
      %22 = dma.hbm_to_vmem [thread:$0]  %s15, 64, %s17, [#allocation3], 64, 64, 4
    $region5: #{tpu_custom_call.1} parent=1 // pred_fallthru
      _
    // Predicated region
    $region6: #{tpu_custom_call.1} parent=1 // pred_check
      _
    $region7: #{tpu_custom_call.1} parent=1 // pred_check_branch
      %24 = sbr.rel (0) target = $region9
    $region8: #{tpu_custom_call.1} parent=1 // pred_region
      %26 = vsyncadd [#allocation6], 0
      %s28 = sshll.u32 %s1, 4
      %s29 = int_to_ptr.hbm [resolvable:$true] %s28
      %s30 = sshll.u32 [#allocation5], 4
      %s31 = int_to_ptr.vmem [resolvable:$true] %s30
      %33 = dma.hbm_to_vmem [thread:$0]  %s29, 16, %s31, [#allocation6]
    $region9: #{tpu_custom_call.1} parent=1 // pred_fallthru
      _
    // Predicated region
    $region10: #{tpu_custom_call.1} parent=1 // pred_check
      _
    $region11: #{tpu_custom_call.1} parent=1 // pred_check_branch
      %35 = sbr.rel (0) target = $region13
    $region12: #{tpu_custom_call.1} parent=1 // pred_region
      %37 = dma.done [#allocation3], 128
    $region13: #{tpu_custom_call.1} parent=1 // pred_fallthru
      _
    // Predicated region
    $region14: #{tpu_custom_call.1} parent=1 // pred_check
      _
    $region15: #{tpu_custom_call.1} parent=1 // pred_check_branch
      %39 = sbr.rel (0) target = $region17
    $region16: #{tpu_custom_call.1} parent=1 // pred_region
      %41 = dma.done [#allocation6], 16
    $region17: #{tpu_custom_call.1} parent=1 // pred_fallthru
      _
    %v42 = vld [vmem:[#allocation2] sm:$0xff]
    %v43 = vld [vmem:[#allocation5] sm:$0x1]
    %v45 = vperm.slane %v43, 0
    %v47 = vmul.f32 %v42, %v45
    %48 = vst [vmem:[#allocation7] sm:$0xff] %v47
    // Predicated region
    $region18: #{tpu_custom_call.1} parent=1 // pred_check
      _
    $region19: #{tpu_custom_call.1} parent=1 // pred_check_branch
      %50 = sbr.rel (0) target = $region21
    $region20: #{tpu_custom_call.1} parent=1 // pred_region
      %52 = vsyncadd [#allocation4], 64
      %s53 = sshll.u32 [#allocation7], 4
      %s54 = int_to_ptr.vmem [resolvable:$true] %s53
      %s55 = sshll.u32 %s2, 4
      %s56 = int_to_ptr.hbm [resolvable:$true] %s55
      %61 = dma.vmem_to_hbm [thread:$0]  %s54, 64, %s56, [#allocation4], 64, 64, 4
    $region21: #{tpu_custom_call.1} parent=1 // pred_fallthru
      _
    // Predicated region
    $region22: #{tpu_custom_call.1} parent=1 // pred_check
      _
    $region23: #{tpu_custom_call.1} parent=1 // pred_check_branch
      %63 = sbr.rel (0) target = $region25
    $region24: #{tpu_custom_call.1} parent=1 // pred_region
      %65 = dma.done [#allocation4], 128
    $region25: #{tpu_custom_call.1} parent=1 // pred_fallthru
      _
    %66 = vsyncpa [#allocation3], 1
    %67 = vsyncpa [#allocation6], 1
    %68 = vsyncpa [#allocation4], 1

</llo_original>
